<compile_context>
chip_gen: v7x
topology: tpu7x:2x2x1
jax: 0.10.0
libtpu: 0.0.40
codegen_flags: <defaults>
</compile_context>

<pallas_src>
import functools

import jax
import jax.numpy as jnp
from jax.experimental import pallas as pl
from jax.experimental.pallas import tpu as pltpu


def _round_up(x, m):
    return (x + m - 1) // m * m


def _resident_spec(shape):
    """BlockSpec for a parameter that stays resident in VMEM.

    Constant index_map -> DMA'd once and kept across grid steps;
    Buffered(1) -> only a single VMEM buffer (default double-buffering would
    allocate the params twice for no benefit).
    """
    idx = lambda i: (0, 0)
    try:
        return pl.BlockSpec(shape, idx, pipeline_mode=pl.Buffered(1))
    except Exception:  # older jax without pipeline_mode / Buffered
        return pl.BlockSpec(shape, idx)


def _mlp_kernel(*refs, num_layers, compute_dtype):
    """Fused MLP on one row-tile.

    refs layout: x_ref, w0, b0, w1, b1, ..., w_{L-1}, b_{L-1}, o_ref
      x_ref : [tm, K]            (input dtype; cast to compute_dtype in-kernel)
      w_i   : [in_i, out_pad_i]  (compute_dtype, resident in VMEM)
      b_i   : [1, out_pad_i]     (f32, resident in VMEM)
      o_ref : [tm, out_pad]
    """
    x_ref = refs[0]
    o_ref = refs[-1]

    # Cast inside the kernel so the wrapper never makes a separate HBM cast pass.
    h = x_ref[...].astype(compute_dtype)
    for i in range(num_layers):
        w_ref = refs[1 + 2 * i]
        b_ref = refs[2 + 2 * i]
        # bf16 x bf16 -> f32 accumulation on the MXU; bias added once per tile.
        y = jnp.dot(h, w_ref[...], preferred_element_type=jnp.float32)
        y = y + b_ref[...]
        if i < num_layers - 1:
            # Cast before ReLU: bf16 max packs 2 elems/lane on v6e/v7x and is
            # numerically identical to relu-then-cast (rounding is monotone, 0->0).
            h = jnp.maximum(y.astype(compute_dtype), 0)
        else:
            o_ref[...] = y.astype(o_ref.dtype)


@functools.partial(
    jax.jit,
    static_argnames=("output_dim", "compute_dtype", "out_dtype", "tm_max"))
def _mlp_forward(x, weights, biases, *, output_dim, compute_dtype, out_dtype,
                 tm_max):
    orig_shape = x.shape
    x2d = x.reshape(-1, orig_shape[-1])
    M, K = x2d.shape
    num_layers = len(weights)
    out_pad = weights[-1].shape[1]

    x_item = x2d.dtype.itemsize
    out_item = jnp.dtype(out_dtype).itemsize
    param_bytes = sum(int(w.size) * w.dtype.itemsize +
                      int(b.size) * b.dtype.itemsize
                      for w, b in zip(weights, biases))
    max_width = max(w.shape[1] for w in weights)

    # --- Row tiling -------------------------------------------------------
    # No explicit M padding: grid = cdiv(M, tm); Pallas masks the ragged last
    # tile (rows are independent, so garbage padded rows never contaminate
    # valid rows and their OOB writes are dropped).
    if M <= 16:
        tm = M  # single tiny tile; block == full dim is always a legal layout
    else:
        # At least 2 grid steps so "parallel" can shard across v7x's two
        # TensorCores (and megacore on v5e/v6e); large M uses tm_max-row tiles.
        tm = min(tm_max, _round_up(-(-M // 2), 16))

    def _vmem_need(tm_):
        return (param_bytes                       # resident, single-buffered
                + 2 * tm_ * K * x_item            # double-buffered x tiles
                + 2 * tm_ * out_pad * out_item    # double-buffered out tiles
                + 2 * tm_ * max_width * 4)        # live f32 activation temps

    try:
        vmem_cap = pltpu.get_tpu_info().vmem_capacity_bytes
    except Exception:
        vmem_cap = 64 * 1024 * 1024  # assume the smallest generation (v7x per-TC)
    budget = int(0.75 * vmem_cap)

    # VMEM-fit guardrail (v7x 64 MiB): shrink the row tile until it fits.
    while tm > 16 and _vmem_need(tm) > budget:
        tm = max(16, _round_up(tm // 2, 16))
    # TODO(synk): if param_bytes alone exceeds the budget (very wide hidden dims
    # on v7x), add a grid axis over the widest layer's output dim instead of
    # keeping that weight fully resident.

    grid = (pl.cdiv(M, tm),)

    # Right-sized scoped-VMEM request (no blanket 32/64 MiB floor/cap).
    vmem_limit = min(int(1.5 * _vmem_need(tm)) + (2 << 20), budget)

    # BlockSpecs: x/out tiled over M; weights & biases resident & single-buffered.
    in_specs = [pl.BlockSpec((tm, K), lambda i: (i, 0))]
    for w, b in zip(weights, biases):
        in_specs.append(_resident_spec(w.shape))
        in_specs.append(_resident_spec(b.shape))
    out_specs = pl.BlockSpec((tm, out_pad), lambda i: (i, 0))

    flops = sum(2 * M * w.shape[0] * w.shape[1] for w in weights)
    bytes_accessed = x2d.size * x_item + M * out_pad * out_item + param_bytes

    kernel = functools.partial(
        _mlp_kernel, num_layers=num_layers, compute_dtype=compute_dtype)

    args = [x2d]
    for w, b in zip(weights, biases):
        args.extend((w, b))

    out_padded = pl.pallas_call(
        kernel,
        out_shape=jax.ShapeDtypeStruct((M, out_pad), out_dtype),
        grid_spec=pltpu.PrefetchScalarGridSpec(
            num_scalar_prefetch=0,
            grid=grid,
            in_specs=in_specs,
            out_specs=out_specs,
        ),
        compiler_params=pltpu.CompilerParams(
            dimension_semantics=("parallel",),
            vmem_limit_bytes=int(vmem_limit),
        ),
        cost_estimate=pl.CostEstimate(
            flops=int(flops),
            transcendentals=0,
            bytes_accessed=int(bytes_accessed),
        ),
    )(*args)

    out = out_padded[:, :output_dim] if out_pad != output_dim else out_padded
    return out.reshape(*orig_shape[:-1], output_dim)


class MLP:
    """Pallas equivalent of the PyTorch MLP: (Linear+ReLU) x (L-1), Linear."""

    def __init__(self, input_dim, hidden_dim, output_dim, num_layers, key,
                 compute_dtype=jnp.bfloat16, out_dtype=jnp.float32):
        self.num_layers = num_layers
        self.input_dim = input_dim
        self.output_dim = output_dim
        self.compute_dtype = compute_dtype
        # out_dtype=bf16 halves writeback/out-tile VMEM if downstream tolerates it.
        self.out_dtype = out_dtype

        h = [hidden_dim] * (num_layers - 1)
        dims_in = [input_dim] + h
        dims_out = h + [output_dim]

        # Padding policy: layer *output* dims padded to multiples of 128 so
        # stores are lane-dense and layers chain on the MXU; the first layer's
        # *input* dim is left unpadded so x never needs a wrapper-side pad.
        # (Real Mask2Former hidden dims (256) are already 128-multiples; on
        # v6e/v7x 256-alignment would also be fine, but padding tiny dims
        # further only burns zero-FLOPs.)
        self.weights = []  # pre-transposed [in(_pad), out_pad], compute_dtype
        self.biases = []   # [1, out_pad], f32
        prev_out_pad = input_dim
        for n, k in zip(dims_in, dims_out):
            key, kw, kb = jax.random.split(key, 3)
            # PyTorch nn.Linear default init: U(-1/sqrt(fan_in), 1/sqrt(fan_in))
            bound = 1.0 / (n ** 0.5)
            w = jax.random.uniform(kw, (k, n), jnp.float32, -bound, bound)  # [out, in]
            b = jax.random.uniform(kb, (k,), jnp.float32, -bound, bound)

            in_pad = prev_out_pad           # input_dim for layer 0, else hidden_pad
            out_pad = _round_up(k, 128)
            w_t = jnp.zeros((in_pad, out_pad), jnp.float32).at[:n, :k].set(w.T)
            b_p = jnp.zeros((1, out_pad), jnp.float32).at[:, :k].set(b)
            self.weights.append(w_t.astype(compute_dtype))
            self.biases.append(b_p)
            prev_out_pad = out_pad

    def __call__(self, x, tm_max=512):
        return _mlp_forward(
            x, tuple(self.weights), tuple(self.biases),
            output_dim=self.output_dim,
            compute_dtype=self.compute_dtype,
            out_dtype=self.out_dtype,
            tm_max=tm_max)


if __name__ == "__main__":
    key = jax.random.PRNGKey(0)
    key, kx, kp = jax.random.split(key, 3)

    batch, seq = 2, 8
    input_dim, hidden_dim, output_dim, num_layers = 32, 64, 16, 3

    x = jax.random.normal(kx, (batch, seq, input_dim), dtype=jnp.float32)

    mlp = MLP(input_dim, hidden_dim, output_dim, num_layers, kp)
    out = jax.block_until_ready(mlp(x))

    # Pure-JAX reference with identical numerics (bf16 operands, f32 accum,
    # cast-before-ReLU like the kernel).
    M = batch * seq
    h = x.reshape(M, input_dim).astype(mlp.compute_dtype)
    y = None
    for i, (w, b) in enumerate(zip(mlp.weights, mlp.biases)):
        y = jnp.dot(h, w, preferred_element_type=jnp.float32) + b
        if i < num_layers - 1:
            h = jnp.maximum(y.astype(mlp.compute_dtype), 0)
    ref = y[:, :output_dim].reshape(batch, seq, output_dim)

    assert out.shape == (batch, seq, output_dim)
    assert out.dtype == jnp.float32
    assert jnp.allclose(out, ref, atol=1e-2, rtol=1e-2)

    print("KERNEL_OK")
</pallas_src>

<mosaic_0001>
module attributes {stable_mosaic.version = 11 : i64} {
  func.func @_mlp_kernel(%arg0: i32, %arg1: memref<16x32xf32, #tpu.memory_space<vmem>>, %arg2: memref<32x128xbf16, #tpu.memory_space<vmem>>, %arg3: memref<1x128xf32, #tpu.memory_space<vmem>>, %arg4: memref<128x128xbf16, #tpu.memory_space<vmem>>, %arg5: memref<1x128xf32, #tpu.memory_space<vmem>>, %arg6: memref<128x128xbf16, #tpu.memory_space<vmem>>, %arg7: memref<1x128xf32, #tpu.memory_space<vmem>>, %arg8: memref<16x128xf32, #tpu.memory_space<vmem>>) attributes {dimension_semantics = [#tpu.dimension_semantics<parallel>], iteration_bounds = array<i64: 1>, scalar_prefetch = 0 : i64, scratch_operands = 0 : i64, tpu.core_type = #tpu.core_type<tc>, window_params = [{transform_indices = @transform_0, window_bounds = array<i64: 16, 32>}, {pipeline_mode = #tpu.pipeline_mode<synchronous>, transform_indices = @transform_1, window_bounds = array<i64: 32, 128>}, {pipeline_mode = #tpu.pipeline_mode<synchronous>, transform_indices = @transform_2, window_bounds = array<i64: 1, 128>}, {pipeline_mode = #tpu.pipeline_mode<synchronous>, transform_indices = @transform_3, window_bounds = array<i64: 128, 128>}, {pipeline_mode = #tpu.pipeline_mode<synchronous>, transform_indices = @transform_4, window_bounds = array<i64: 1, 128>}, {pipeline_mode = #tpu.pipeline_mode<synchronous>, transform_indices = @transform_5, window_bounds = array<i64: 128, 128>}, {pipeline_mode = #tpu.pipeline_mode<synchronous>, transform_indices = @transform_6, window_bounds = array<i64: 1, 128>}, {transform_indices = @transform_7, window_bounds = array<i64: 16, 128>}]} {
    %c0 = arith.constant 0 : index
    %c0_0 = arith.constant 0 : index
    %0 = vector.load %arg1[%c0, %c0_0] : memref<16x32xf32, #tpu.memory_space<vmem>>, vector<16x32xf32>
    %1 = arith.truncf %0 : vector<16x32xf32> to vector<16x32xbf16>
    %c0_1 = arith.constant 0 : index
    %c0_2 = arith.constant 0 : index
    %2 = vector.load %arg2[%c0_1, %c0_2] : memref<32x128xbf16, #tpu.memory_space<vmem>>, vector<32x128xbf16>
    %cst = arith.constant dense<0.000000e+00> : vector<16x128xf32>
    %3 = tpu.matmul %1, %2, %cst {dimension_numbers = #tpu.dot_dimension_numbers<[1], [0], [0], [1], [0, 0, 1, 1], [], []>} : vector<16x32xbf16>, vector<32x128xbf16>, vector<16x128xf32> -> vector<16x128xf32>
    %c0_3 = arith.constant 0 : index
    %c0_4 = arith.constant 0 : index
    %4 = vector.load %arg3[%c0_3, %c0_4] : memref<1x128xf32, #tpu.memory_space<vmem>>, vector<1x128xf32>
    %5 = vector.broadcast %4 : vector<1x128xf32> to vector<16x128xf32>
    %6 = arith.addf %3, %5 : vector<16x128xf32>
    %7 = arith.truncf %6 : vector<16x128xf32> to vector<16x128xbf16>
    %cst_5 = arith.constant 0.000000e+00 : bf16
    %8 = vector.broadcast %cst_5 : bf16 to vector<16x128xbf16>
    %9 = arith.maximumf %7, %8 : vector<16x128xbf16>
    %c0_6 = arith.constant 0 : index
    %c0_7 = arith.constant 0 : index
    %10 = vector.load %arg4[%c0_6, %c0_7] : memref<128x128xbf16, #tpu.memory_space<vmem>>, vector<128x128xbf16>
    %cst_8 = arith.constant dense<0.000000e+00> : vector<16x128xf32>
    %11 = tpu.matmul %9, %10, %cst_8 {dimension_numbers = #tpu.dot_dimension_numbers<[1], [0], [0], [1], [0, 0, 1, 1], [], []>} : vector<16x128xbf16>, vector<128x128xbf16>, vector<16x128xf32> -> vector<16x128xf32>
    %c0_9 = arith.constant 0 : index
    %c0_10 = arith.constant 0 : index
    %12 = vector.load %arg5[%c0_9, %c0_10] : memref<1x128xf32, #tpu.memory_space<vmem>>, vector<1x128xf32>
    %13 = vector.broadcast %12 : vector<1x128xf32> to vector<16x128xf32>
    %14 = arith.addf %11, %13 : vector<16x128xf32>
    %15 = arith.truncf %14 : vector<16x128xf32> to vector<16x128xbf16>
    %cst_11 = arith.constant 0.000000e+00 : bf16
    %16 = vector.broadcast %cst_11 : bf16 to vector<16x128xbf16>
    %17 = arith.maximumf %15, %16 : vector<16x128xbf16>
    %c0_12 = arith.constant 0 : index
    %c0_13 = arith.constant 0 : index
    %18 = vector.load %arg6[%c0_12, %c0_13] : memref<128x128xbf16, #tpu.memory_space<vmem>>, vector<128x128xbf16>
    %cst_14 = arith.constant dense<0.000000e+00> : vector<16x128xf32>
    %19 = tpu.matmul %17, %18, %cst_14 {dimension_numbers = #tpu.dot_dimension_numbers<[1], [0], [0], [1], [0, 0, 1, 1], [], []>} : vector<16x128xbf16>, vector<128x128xbf16>, vector<16x128xf32> -> vector<16x128xf32>
    %c0_15 = arith.constant 0 : index
    %c0_16 = arith.constant 0 : index
    %20 = vector.load %arg7[%c0_15, %c0_16] : memref<1x128xf32, #tpu.memory_space<vmem>>, vector<1x128xf32>
    %21 = vector.broadcast %20 : vector<1x128xf32> to vector<16x128xf32>
    %22 = arith.addf %19, %21 : vector<16x128xf32>
    %c0_17 = arith.constant 0 : index
    %c0_18 = arith.constant 0 : index
    %23 = vector.load %arg8[%c0_17, %c0_18] : memref<16x128xf32, #tpu.memory_space<vmem>>, vector<16x128xf32>
    tpu.vector_store %arg8[%c0_17, %c0_18], %22 {strides = array<i32>} : memref<16x128xf32, #tpu.memory_space<vmem>>, vector<16x128xf32>,
    return
  }
  func.func @transform_0(%arg0: i32) -> (i32, i32) {
    %c0_i32 = arith.constant 0 : i32
    %c0_i32_0 = arith.constant 0 : i32
    return %arg0, %c0_i32 : i32, i32
  }
  func.func @transform_1(%arg0: i32) -> (i32, i32) {
    %c0_i32 = arith.constant 0 : i32
    %c0_i32_0 = arith.constant 0 : i32
    %c0_i32_1 = arith.constant 0 : i32
    return %c0_i32, %c0_i32_0 : i32, i32
  }
  func.func @transform_2(%arg0: i32) -> (i32, i32) {
    %c0_i32 = arith.constant 0 : i32
    %c0_i32_0 = arith.constant 0 : i32
    %c0_i32_1 = arith.constant 0 : i32
    return %c0_i32, %c0_i32_0 : i32, i32
  }
  func.func @transform_3(%arg0: i32) -> (i32, i32) {
    %c0_i32 = arith.constant 0 : i32
    %c0_i32_0 = arith.constant 0 : i32
    %c0_i32_1 = arith.constant 0 : i32
    return %c0_i32, %c0_i32_0 : i32, i32
  }
  func.func @transform_4(%arg0: i32) -> (i32, i32) {
    %c0_i32 = arith.constant 0 : i32
    %c0_i32_0 = arith.constant 0 : i32
    %c0_i32_1 = arith.constant 0 : i32
    return %c0_i32, %c0_i32_0 : i32, i32
  }
  func.func @transform_5(%arg0: i32) -> (i32, i32) {
    %c0_i32 = arith.constant 0 : i32
    %c0_i32_0 = arith.constant 0 : i32
    %c0_i32_1 = arith.constant 0 : i32
    return %c0_i32, %c0_i32_0 : i32, i32
  }
  func.func @transform_6(%arg0: i32) -> (i32, i32) {
    %c0_i32 = arith.constant 0 : i32
    %c0_i32_0 = arith.constant 0 : i32
    %c0_i32_1 = arith.constant 0 : i32
    return %c0_i32, %c0_i32_0 : i32, i32
  }
  func.func @transform_7(%arg0: i32) -> (i32, i32) {
    %c0_i32 = arith.constant 0 : i32
    %c0_i32_0 = arith.constant 0 : i32
    return %arg0, %c0_i32 : i32, i32
  }
}

</mosaic_0001>

<llo_original>
// kernel: _mlp_forward.1
$region0: #{_mlp_forward.1}
  #allocation0 [shape = 'u32[]', space=smem, size = 0x4, offset = 0x4, fixed_abs, tag = 'smem constant byte address 0x4 - core index']
  #allocation1 [shape = 'u32[144,128]{1,0:T(1,128)}', space=vmem, size = 0x12000, scoped, tag = 'internal scratch']
  %s0 = inlined_call_operand.hbm [shape: f32[16,32], index: 0, kind: input, shape index: {}]
  %s1 = inlined_call_operand.hbm [shape: bf16[32,128], index: 1, kind: input, shape index: {}]
  %s2 = inlined_call_operand.vmem [shape: f32[1,128], index: 2, kind: input, shape index: {}]
  %s3 = inlined_call_operand.hbm [shape: bf16[128,128], index: 3, kind: input, shape index: {}]
  %s4 = inlined_call_operand.vmem [shape: f32[1,128], index: 4, kind: input, shape index: {}]
  %s5 = inlined_call_operand.hbm [shape: bf16[128,128], index: 5, kind: input, shape index: {}]
  %s6 = inlined_call_operand.vmem [shape: f32[1,128], index: 6, kind: input, shape index: {}]
  %s7 = inlined_call_operand.vmem [shape: f32[16,128], index: 7, kind: output, shape index: {}]
  %s8 = sld [smem:[#allocation0]]
  $region54: #{_mlp_forward.1} parent=0
    _
  %s10 = ssub.s32 1, %s8
  %s11 = scalar_select 0, %s10, %s8
  $region1: #{_mlp_forward.1} parent=0
    #allocation2 [shape = 'u8[8192]{0}', space=vmem, size = 0x2000, scoped, tag = 'input window, operand 0, single buffered']
    #allocation3 [shape = 's32[1]{0}', space=sflag, size = 0x4, scoped, tag = 'scoped memory for _mlp_forward.1']
    #allocation4 [shape = 'u8[8192]{0}', space=vmem, size = 0x2000, scoped, tag = 'input window, operand 1, single buffered']
    #allocation5 [shape = 's32[1]{0}', space=sflag, size = 0x4, scoped, tag = 'scoped memory for _mlp_forward.1']
    #allocation6 [shape = 'u8[32768]{0}', space=vmem, size = 0x8000, scoped, tag = 'input window, operand 3, single buffered']
    #allocation7 [shape = 'u8[32768]{0}', space=vmem, size = 0x8000, scoped, tag = 'input window, operand 5, single buffered']
    #allocation8 [shape = 's32[1]{0}', space=sflag, size = 0x4, scoped, tag = 'scoped memory for _mlp_forward.1']
    %12 = vsyncpa [#allocation3], 0
    %13 = vsyncpa [#allocation5], 0
    %14 = vsyncpa [#allocation8], 0
    // Predicated region
    $region2: #{_mlp_forward.1} parent=1 // pred_check
      _
    $region3: #{_mlp_forward.1} parent=1 // pred_check_branch
      %16 = sbr.rel (0) target = $region5
    $region4: #{_mlp_forward.1} parent=1 // pred_region
      %s18 = ssub.s32 256, 256
      %19 = vsyncadd [#allocation3], %s18
      %s20 = sshll.u32 [#allocation2], 4
      %s21 = int_to_ptr.vmem [resolvable:$true] %s20
      %26 = dma.hbm_to_vmem [thread:$0]  %s0, 256, %s21, [#allocation3], 128, 128, 8
    $region5: #{_mlp_forward.1} parent=1 // pred_fallthru
      _
    // Predicated region
    $region6: #{_mlp_forward.1} parent=1 // pred_check
      _
    $region7: #{_mlp_forward.1} parent=1 // pred_check_branch
      %28 = sbr.rel (0) target = $region9
    $region8: #{_mlp_forward.1} parent=1 // pred_region
      %s30 = ssub.s32 256, 256
      %31 = vsyncadd [#allocation5], %s30
      %s32 = sshll.u32 [#allocation4], 4
      %s33 = int_to_ptr.vmem [resolvable:$true] %s32
      %38 = dma.hbm_to_vmem [thread:$0]  %s1, 256, %s33, [#allocation5], 64, 64, 4
    $region9: #{_mlp_forward.1} parent=1 // pred_fallthru
      _
    // Predicated region
    $region10: #{_mlp_forward.1} parent=1 // pred_check
      _
    $region11: #{_mlp_forward.1} parent=1 // pred_check_branch
      %40 = sbr.rel (0) target = $region13
    $region12: #{_mlp_forward.1} parent=1 // pred_region
      _
    $region13: #{_mlp_forward.1} parent=1 // pred_fallthru
      _
    // Predicated region
    $region14: #{_mlp_forward.1} parent=1 // pred_check
      _
    $region15: #{_mlp_forward.1} parent=1 // pred_check_branch
      %42 = sbr.rel (0) target = $region17
    $region16: #{_mlp_forward.1} parent=1 // pred_region
      %s44 = ssub.s32 1024, 1024
      %45 = vsyncadd [#allocation5], %s44
      %s46 = sshll.u32 [#allocation6], 4
      %s47 = int_to_ptr.vmem [resolvable:$true] %s46
      %52 = dma.hbm_to_vmem [thread:$0]  %s3, 1024, %s47, [#allocation5], 64, 64, 4
    $region17: #{_mlp_forward.1} parent=1 // pred_fallthru
      _
    // Predicated region
    $region18: #{_mlp_forward.1} parent=1 // pred_check
      _
    $region19: #{_mlp_forward.1} parent=1 // pred_check_branch
      %54 = sbr.rel (0) target = $region21
    $region20: #{_mlp_forward.1} parent=1 // pred_region
      _
    $region21: #{_mlp_forward.1} parent=1 // pred_fallthru
      _
    // Predicated region
    $region22: #{_mlp_forward.1} parent=1 // pred_check
      _
    $region23: #{_mlp_forward.1} parent=1 // pred_check_branch
      %56 = sbr.rel (0) target = $region25
    $region24: #{_mlp_forward.1} parent=1 // pred_region
      %s58 = ssub.s32 1024, 1024
      %59 = vsyncadd [#allocation8], %s58
      %s60 = sshll.u32 [#allocation7], 4
      %s61 = int_to_ptr.vmem [resolvable:$true] %s60
      %66 = dma.hbm_to_vmem [thread:$0]  %s5, 1024, %s61, [#allocation8], 64, 64, 4
    $region25: #{_mlp_forward.1} parent=1 // pred_fallthru
      _
    // Predicated region
    $region26: #{_mlp_forward.1} parent=1 // pred_check
      _
    $region27: #{_mlp_forward.1} parent=1 // pred_check_branch
      %68 = sbr.rel (0) target = $region29
    $region28: #{_mlp_forward.1} parent=1 // pred_region
      _
    $region29: #{_mlp_forward.1} parent=1 // pred_fallthru
      _
    // Predicated region
    $region30: #{_mlp_forward.1} parent=1 // pred_check
      _
    $region31: #{_mlp_forward.1} parent=1 // pred_check_branch
      %70 = sbr.rel (0) target = $region33
    $region32: #{_mlp_forward.1} parent=1 // pred_region
      %71 = dma.done [#allocation3], 256
    $region33: #{_mlp_forward.1} parent=1 // pred_fallthru
      _
    // Predicated region
    $region34: #{_mlp_forward.1} parent=1 // pred_check
      _
    $region35: #{_mlp_forward.1} parent=1 // pred_check_branch
      %73 = sbr.rel (0) target = $region37
    $region36: #{_mlp_forward.1} parent=1 // pred_region
      %74 = dma.done [#allocation5], 256
    $region37: #{_mlp_forward.1} parent=1 // pred_fallthru
      _
    // Predicated region
    $region38: #{_mlp_forward.1} parent=1 // pred_check
      _
    $region39: #{_mlp_forward.1} parent=1 // pred_check_branch
      %76 = sbr.rel (0) target = $region41
    $region40: #{_mlp_forward.1} parent=1 // pred_region
      %77 = dma.done [#allocation5], 1024
    $region41: #{_mlp_forward.1} parent=1 // pred_fallthru
      _
    // Predicated region
    $region42: #{_mlp_forward.1} parent=1 // pred_check
      _
    $region43: #{_mlp_forward.1} parent=1 // pred_check_branch
      %79 = sbr.rel (0) target = $region45
    $region44: #{_mlp_forward.1} parent=1 // pred_region
      %80 = dma.done [#allocation8], 1024
    $region45: #{_mlp_forward.1} parent=1 // pred_fallthru
      _
    %v82 = vld [vmem:[#allocation2] sm:$0xff]
    %v83 = vld [vmem:[#allocation2 + $0x8] sm:$0xff]
    %v84 = vpack.c.bf16 %v83, %v82
    %v85 = vld [vmem:[#allocation4] sm:$0xf]
    %v86 = vld [vmem:[#allocation4 + $0x4] sm:$0xf]
    %v87 = vld [vmem:[#allocation4 + $0x8] sm:$0xf]
    %v88 = vld [vmem:[#allocation4 + $0xc] sm:$0xf]
    %v89 = vld [vmem:[%s2] sm:$0x1]
    %v91 = vlaneseq
    %v92 = vshrl.u32 %v91, 7
    %v93 = vsub.s32 0, %v92
    %v94 = vrot.slane %v89, %v93
    %v100 = vunpack.c.l.b16 %v85
    %v101 = vunpack.c.l.b16 %v86
    %v102 = vunpack.c.l.b16 %v87
    %v103 = vunpack.c.l.b16 %v88
    %v104 = vpack.c.b16 %v101, %v100
    %v105 = vpack.c.b16 %v103, %v102
    %vm108 = vcmask 261120
    %v110 = vsel %vm108, %v84, 0
    %112 = vmatprep.subr.bf16.mxu0 0
    %113 = vmatpush1.bf16.msra.mxu0 %v104
    %114 = vmatprep.subr.bf16.mxu0 0
    %115 = vmatpush1.bf16.msra.mxu0 %v105
    %116 = vmatprep.subr.bf16.mxu0 0
    %117 = vmatpush1.bf16.msra.mxu0 0
    %118 = vmatprep.subr.bf16.mxu0 0
    %119 = vmatpush1.bf16.msra.mxu0 0
    %120 = vmatprep.subr.bf16.mxu0 0
    %121 = vmatpush1.bf16.msra.mxu0 0
    %122 = vmatprep.subr.bf16.mxu0 0
    %123 = vmatpush1.bf16.msra.mxu0 0
    %124 = vmatprep.subr.bf16.mxu0 0
    %125 = vmatpush1.bf16.msra.mxu0 0
    %126 = vmatprep.subr.bf16.mxu0 0
    %127 = vmatpush1.bf16.msra.mxu0 0
    %128 = vmatprep.subr.bf16.mxu0 0
    %129 = vmatpush1.bf16.msra.mxu0 0
    %130 = vmatprep.subr.bf16.mxu0 0
    %131 = vmatpush1.bf16.msra.mxu0 0
    %132 = vmatprep.subr.bf16.mxu0 0
    %133 = vmatpush1.bf16.msra.mxu0 0
    %134 = vmatprep.subr.bf16.mxu0 0
    %135 = vmatpush1.bf16.msra.mxu0 0
    %136 = vmatprep.subr.bf16.mxu0 0
    %137 = vmatpush1.bf16.msra.mxu0 0
    %138 = vmatprep.subr.bf16.mxu0 0
    %139 = vmatpush1.bf16.msra.mxu0 0
    %140 = vmatprep.subr.bf16.mxu0 0
    %141 = vmatpush1.bf16.msra.mxu0 0
    %142 = vmatprep.subr.bf16.mxu0 0
    %143 = vmatpush1.bf16.msra.mxu0 0
    %144 = vmatprep.mubr.bf16.mxu0 0
    %145 = vmatmul.mubr.bf16.gmra.mrb[0].mxu0 %v110
    %v146 = vpop.f32.mrb[0].mxu0
    %v147 = vadd.f32 %v94, %v146
    %v148 = vpop.f32.mrb[0].mxu0
    %v149 = vpop.f32.mrb[0].mxu0
    %v150 = vadd.f32 %v94, %v149
    %v151 = vpop.f32.mrb[0].mxu0
    %152 = vdwg.mxu0
    %v153 = vpack.c.bf16 %v150, %v147
    %v154 = vmax.bf16 %v153, 0
    %v155 = vld [vmem:[#allocation6] sm:$0xf]
    %v156 = vld [vmem:[#allocation6 + $0x4] sm:$0xf]
    %v157 = vld [vmem:[#allocation6 + $0x8] sm:$0xf]
    %v158 = vld [vmem:[#allocation6 + $0xc] sm:$0xf]
    %v159 = vld [vmem:[#allocation6 + $0x10] sm:$0xf]
    %v160 = vld [vmem:[#allocation6 + $0x14] sm:$0xf]
    %v161 = vld [vmem:[#allocation6 + $0x18] sm:$0xf]
    %v162 = vld [vmem:[#allocation6 + $0x1c] sm:$0xf]
    %v163 = vld [vmem:[#allocation6 + $0x20] sm:$0xf]
    %v164 = vld [vmem:[#allocation6 + $0x24] sm:$0xf]
    %v165 = vld [vmem:[#allocation6 + $0x28] sm:$0xf]
    %v166 = vld [vmem:[#allocation6 + $0x2c] sm:$0xf]
    %v167 = vld [vmem:[#allocation6 + $0x30] sm:$0xf]
    %v168 = vld [vmem:[#allocation6 + $0x34] sm:$0xf]
    %v169 = vld [vmem:[#allocation6 + $0x38] sm:$0xf]
    %v170 = vld [vmem:[#allocation6 + $0x3c] sm:$0xf]
    %v171 = vld [vmem:[%s4] sm:$0x1]
    %v173 = vlaneseq
    %v174 = vshrl.u32 %v173, 7
    %v175 = vsub.s32 0, %v174
    %v176 = vrot.slane %v171, %v175
    %v194 = vunpack.c.l.b16 %v155
    %v195 = vunpack.c.l.b16 %v156
    %v196 = vunpack.c.l.b16 %v157
    %v197 = vunpack.c.l.b16 %v158
    %v198 = vunpack.c.l.b16 %v159
    %v199 = vunpack.c.l.b16 %v160
    %v200 = vunpack.c.l.b16 %v161
    %v201 = vunpack.c.l.b16 %v162
    %v202 = vunpack.c.l.b16 %v163
    %v203 = vunpack.c.l.b16 %v164
    %v204 = vunpack.c.l.b16 %v165
    %v205 = vunpack.c.l.b16 %v166
    %v206 = vunpack.c.l.b16 %v167
    %v207 = vunpack.c.l.b16 %v168
    %v208 = vunpack.c.l.b16 %v169
    %v209 = vunpack.c.l.b16 %v170
    %v210 = vpack.c.b16 %v195, %v194
    %v211 = vpack.c.b16 %v197, %v196
    %v212 = vpack.c.b16 %v199, %v198
    %v213 = vpack.c.b16 %v201, %v200
    %v214 = vpack.c.b16 %v203, %v202
    %v215 = vpack.c.b16 %v205, %v204
    %v216 = vpack.c.b16 %v207, %v206
    %v217 = vpack.c.b16 %v209, %v208
    %226 = vmatprep.subr.bf16.mxu0 0
    %227 = vmatpush1.bf16.msra.mxu0 %v210
    %228 = vmatprep.subr.bf16.mxu0 0
    %229 = vmatpush1.bf16.msra.mxu0 %v211
    %230 = vmatprep.subr.bf16.mxu0 0
    %231 = vmatpush1.bf16.msra.mxu0 %v212
    %232 = vmatprep.subr.bf16.mxu0 0
    %233 = vmatpush1.bf16.msra.mxu0 %v213
    %234 = vmatprep.subr.bf16.mxu0 0
    %235 = vmatpush1.bf16.msra.mxu0 %v214
    %236 = vmatprep.subr.bf16.mxu0 0
    %237 = vmatpush1.bf16.msra.mxu0 %v215
    %238 = vmatprep.subr.bf16.mxu0 0
    %239 = vmatpush1.bf16.msra.mxu0 %v216
    %240 = vmatprep.subr.bf16.mxu0 0
    %241 = vmatpush1.bf16.msra.mxu0 %v217
    %242 = vmatprep.subr.bf16.mxu0 0
    %243 = vmatpush1.bf16.msra.mxu0 0
    %244 = vmatprep.subr.bf16.mxu0 0
    %245 = vmatpush1.bf16.msra.mxu0 0
    %246 = vmatprep.subr.bf16.mxu0 0
    %247 = vmatpush1.bf16.msra.mxu0 0
    %248 = vmatprep.subr.bf16.mxu0 0
    %249 = vmatpush1.bf16.msra.mxu0 0
    %250 = vmatprep.subr.bf16.mxu0 0
    %251 = vmatpush1.bf16.msra.mxu0 0
    %252 = vmatprep.subr.bf16.mxu0 0
    %253 = vmatpush1.bf16.msra.mxu0 0
    %254 = vmatprep.subr.bf16.mxu0 0
    %255 = vmatpush1.bf16.msra.mxu0 0
    %256 = vmatprep.subr.bf16.mxu0 0
    %257 = vmatpush1.bf16.msra.mxu0 0
    %258 = vmatprep.mubr.bf16.mxu0 0
    %259 = vmatmul.mubr.bf16.gmra.mrb[0].mxu0 %v154
    %v260 = vpop.f32.mrb[0].mxu0
    %v261 = vadd.f32 %v176, %v260
    %v262 = vpop.f32.mrb[0].mxu0
    %v263 = vpop.f32.mrb[0].mxu0
    %v264 = vadd.f32 %v176, %v263
    %v265 = vpop.f32.mrb[0].mxu0
    %266 = vdwg.mxu0
    %v267 = vpack.c.bf16 %v264, %v261
    %v268 = vmax.bf16 %v267, 0
    %v269 = vld [vmem:[#allocation7] sm:$0xf]
    %v270 = vld [vmem:[#allocation7 + $0x4] sm:$0xf]
    %v271 = vld [vmem:[#allocation7 + $0x8] sm:$0xf]
    %v272 = vld [vmem:[#allocation7 + $0xc] sm:$0xf]
    %v273 = vld [vmem:[#allocation7 + $0x10] sm:$0xf]
    %v274 = vld [vmem:[#allocation7 + $0x14] sm:$0xf]
    %v275 = vld [vmem:[#allocation7 + $0x18] sm:$0xf]
    %v276 = vld [vmem:[#allocation7 + $0x1c] sm:$0xf]
    %v277 = vld [vmem:[#allocation7 + $0x20] sm:$0xf]
    %v278 = vld [vmem:[#allocation7 + $0x24] sm:$0xf]
    %v279 = vld [vmem:[#allocation7 + $0x28] sm:$0xf]
    %v280 = vld [vmem:[#allocation7 + $0x2c] sm:$0xf]
    %v281 = vld [vmem:[#allocation7 + $0x30] sm:$0xf]
    %v282 = vld [vmem:[#allocation7 + $0x34] sm:$0xf]
    %v283 = vld [vmem:[#allocation7 + $0x38] sm:$0xf]
    %v284 = vld [vmem:[#allocation7 + $0x3c] sm:$0xf]
    %v285 = vld [vmem:[%s6] sm:$0x1]
    %v287 = vlaneseq
    %v288 = vshrl.u32 %v287, 7
    %v289 = vsub.s32 0, %v288
    %v290 = vrot.slane %v285, %v289
    %v308 = vunpack.c.l.b16 %v269
    %v309 = vunpack.c.l.b16 %v270
    %v310 = vunpack.c.l.b16 %v271
    %v311 = vunpack.c.l.b16 %v272
    %v312 = vunpack.c.l.b16 %v273
    %v313 = vunpack.c.l.b16 %v274
    %v314 = vunpack.c.l.b16 %v275
    %v315 = vunpack.c.l.b16 %v276
    %v316 = vunpack.c.l.b16 %v277
    %v317 = vunpack.c.l.b16 %v278
    %v318 = vunpack.c.l.b16 %v279
    %v319 = vunpack.c.l.b16 %v280
    %v320 = vunpack.c.l.b16 %v281
    %v321 = vunpack.c.l.b16 %v282
    %v322 = vunpack.c.l.b16 %v283
    %v323 = vunpack.c.l.b16 %v284
    %v324 = vpack.c.b16 %v309, %v308
    %v325 = vpack.c.b16 %v311, %v310
    %v326 = vpack.c.b16 %v313, %v312
    %v327 = vpack.c.b16 %v315, %v314
    %v328 = vpack.c.b16 %v317, %v316
    %v329 = vpack.c.b16 %v319, %v318
    %v330 = vpack.c.b16 %v321, %v320
    %v331 = vpack.c.b16 %v323, %v322
    %340 = vmatprep.subr.bf16.mxu0 0
    %341 = vmatpush1.bf16.msra.mxu0 %v324
    %342 = vmatprep.subr.bf16.mxu0 0
    %343 = vmatpush1.bf16.msra.mxu0 %v325
    %344 = vmatprep.subr.bf16.mxu0 0
    %345 = vmatpush1.bf16.msra.mxu0 %v326
    %346 = vmatprep.subr.bf16.mxu0 0
    %347 = vmatpush1.bf16.msra.mxu0 %v327
    %348 = vmatprep.subr.bf16.mxu0 0
    %349 = vmatpush1.bf16.msra.mxu0 %v328
    %350 = vmatprep.subr.bf16.mxu0 0
    %351 = vmatpush1.bf16.msra.mxu0 %v329
    %352 = vmatprep.subr.bf16.mxu0 0
    %353 = vmatpush1.bf16.msra.mxu0 %v330
    %354 = vmatprep.subr.bf16.mxu0 0
    %355 = vmatpush1.bf16.msra.mxu0 %v331
    %356 = vmatprep.subr.bf16.mxu0 0
    %357 = vmatpush1.bf16.msra.mxu0 0
    %358 = vmatprep.subr.bf16.mxu0 0
    %359 = vmatpush1.bf16.msra.mxu0 0
    %360 = vmatprep.subr.bf16.mxu0 0
    %361 = vmatpush1.bf16.msra.mxu0 0
    %362 = vmatprep.subr.bf16.mxu0 0
    %363 = vmatpush1.bf16.msra.mxu0 0
    %364 = vmatprep.subr.bf16.mxu0 0
    %365 = vmatpush1.bf16.msra.mxu0 0
    %366 = vmatprep.subr.bf16.mxu0 0
    %367 = vmatpush1.bf16.msra.mxu0 0
    %368 = vmatprep.subr.bf16.mxu0 0
    %369 = vmatpush1.bf16.msra.mxu0 0
    %370 = vmatprep.subr.bf16.mxu0 0
    %371 = vmatpush1.bf16.msra.mxu0 0
    %372 = vmatprep.mubr.bf16.mxu0 0
    %373 = vmatmul.mubr.bf16.gmra.mrb[0].mxu0 %v268
    %v374 = vpop.f32.mrb[0].mxu0
    %v375 = vadd.f32 %v290, %v374
    %v376 = vpop.f32.mrb[0].mxu0
    %v377 = vpop.f32.mrb[0].mxu0
    %v378 = vadd.f32 %v290, %v377
    %v379 = vpop.f32.mrb[0].mxu0
    %380 = vdwg.mxu0
    %381 = vst [vmem:[%s7] sm:$0xff] %v375
    %382 = vst [vmem:[%s7 + $0x8] sm:$0xff] %v378
    // Predicated region
    $region46: #{_mlp_forward.1} parent=1 // pred_check
      _
    $region47: #{_mlp_forward.1} parent=1 // pred_check_branch
      %384 = sbr.rel (0) target = $region49
    $region48: #{_mlp_forward.1} parent=1 // pred_region
      _
    $region49: #{_mlp_forward.1} parent=1 // pred_fallthru
      _
    // Predicated region
    $region50: #{_mlp_forward.1} parent=1 // pred_check
      _
    $region51: #{_mlp_forward.1} parent=1 // pred_check_branch
      %386 = sbr.rel (0) target = $region53
    $region52: #{_mlp_forward.1} parent=1 // pred_region
      _
    $region53: #{_mlp_forward.1} parent=1 // pred_fallthru
      _
    %387 = vsyncpa [#allocation3], 1
    %388 = vsyncpa [#allocation5], 1
    %389 = vsyncpa [#allocation8], 1

</llo_original>
